<compile_context>
chip_gen: v5e
topology: v5e:2x2
jax: 0.10.0
libtpu: 0.0.40
codegen_flags: <defaults>
</compile_context>

<pallas_src>
import functools

import jax
import jax.numpy as jnp
from jax.experimental import pallas as pl
from jax.experimental.pallas import tpu as pltpu

_LANE = 128


def _dice_kernel(pred_ref, tgt_ref, inter_ref, union_ref, *,
                 tail_len, has_tail, activate):
    k = pl.program_id(1)
    last = pl.num_programs(1) - 1

    @pl.when(k == 0)
    def _():
        inter_ref[...] = jnp.zeros_like(inter_ref)
        union_ref[...] = jnp.zeros_like(union_ref)

    p = pred_ref[...].astype(jnp.float32)   # (row_block, chunk)
    t = tgt_ref[...].astype(jnp.float32)    # (row_block, chunk)
    if activate:
        # Default sigmoid is comfortably hidden under the HBM stream on
        # v6e/v7x; revisit with exp + pl.reciprocal(approx=True) only if the
        # v5e EUP ever becomes the binding unit.
        p = jax.nn.sigmoid(p)

    def accumulate(pv, tv):
        # Per-row running sums; the cross-lane reduce uses the idle XLU slot.
        inter_row = jnp.sum(pv * tv, axis=1, keepdims=True)   # (row_block, 1)
        union_row = jnp.sum(pv + tv, axis=1, keepdims=True)   # (row_block, 1)
        inter_ref[...] += jnp.broadcast_to(inter_row, inter_ref.shape)
        union_ref[...] += jnp.broadcast_to(union_row, union_ref.shape)

    if has_tail:
        # Interior chunks: fully valid, no masking work at all.
        @pl.when(k != last)
        def _():
            accumulate(p, t)

        # Only the last chunk can contain out-of-bounds (garbage) lanes.
        @pl.when(k == last)
        def _():
            lane = jax.lax.broadcasted_iota(jnp.int32, p.shape, 1)
            valid = lane < tail_len
            accumulate(jnp.where(valid, p, 0.0), jnp.where(valid, t, 0.0))
    else:
        accumulate(p, t)


def _vmem_budget_bytes():
    """Per-generation budget for the double-buffered input streams."""
    cap = None
    try:
        info = pltpu.get_tpu_info()
        cap = getattr(info, "vmem_capacity_bytes", None)
    except Exception:
        cap = None
    if cap is None:
        cap = 64 * 1024 * 1024   # conservative: v7x physical VMEM per core
    return int(max(8 << 20, min(24 << 20, int(cap) // 3)))


def _pick_row_block(rows, rows_per_batch, batch_size, max_rows_per_block):
    """Largest row block <= max_rows_per_block that evenly divides `rows`."""
    max_rows = max(rows_per_batch, int(max_rows_per_block))
    if rows <= max_rows:
        return rows
    if rows_per_batch == 8:
        best = 1
        for d in range(1, max_rows // 8 + 1):
            if batch_size % d == 0:
                best = d
        return 8 * best
    # Unpacked fallback (rows == B, possibly not a multiple of 8): keep a
    # single full-height block so the (8,128) rule is satisfied by equality.
    return rows


def single_class_dice_loss(predictions, targets, activate=False,
                           max_chunk=None, max_rows_per_block=512):
    """predictions: (B, 1, H, W); targets: (B, H, W).  Returns scalar loss."""
    assert predictions.ndim == 4
    assert targets.ndim == 3
    assert predictions.shape[1] == 1

    B = int(targets.shape[0])
    N = int(predictions.shape[2]) * int(predictions.shape[3])
    assert int(targets.shape[1]) * int(targets.shape[2]) == N

    # Pack each batch row into 8 sublane sub-rows when possible (full vreg
    # occupancy); contiguous reshape => no HBM copy, native dtype preserved.
    rows_per_batch = 8 if (N % 8 == 0) else 1
    rows = B * rows_per_batch
    n_sub = N // rows_per_batch

    pred2d = predictions.reshape(rows, n_sub)
    tgt2d = targets.reshape(rows, n_sub)

    row_block = _pick_row_block(rows, rows_per_batch, B, max_rows_per_block)
    n_row_blocks = rows // row_block

    # Chunk sizing: only the two double-buffered input streams count now
    # (per-row accumulators are negligible).
    in_bytes = pred2d.dtype.itemsize + tgt2d.dtype.itemsize
    per_col = row_block * in_bytes * 2          # 2 pipeline buffers per input
    budget = _vmem_budget_bytes()
    chunk = max(_LANE, (budget // per_col) // _LANE * _LANE)
    if max_chunk is not None:
        chunk = min(chunk, max(_LANE, (int(max_chunk) // _LANE) * _LANE))
    n_needed = pl.cdiv(n_sub, _LANE) * _LANE
    chunk = min(chunk, n_needed)

    n_chunks = pl.cdiv(n_sub, chunk)
    tail_len = n_sub - (n_chunks - 1) * chunk
    has_tail = (n_sub % chunk) != 0

    # Enough for the streamed buffers + small per-row outputs + headroom,
    # capped well under v7x's 64 MiB physical VMEM.
    vmem_limit = int(min(40 << 20, max(16 << 20, per_col * chunk + (4 << 20))))

    kernel = functools.partial(
        _dice_kernel, tail_len=tail_len, has_tail=has_tail, activate=activate)

    inter_out, union_out = pl.pallas_call(
        kernel,
        out_shape=(jax.ShapeDtypeStruct((rows, _LANE), jnp.float32),
                   jax.ShapeDtypeStruct((rows, _LANE), jnp.float32)),
        grid_spec=pltpu.PrefetchScalarGridSpec(
            num_scalar_prefetch=0,
            grid=(n_row_blocks, n_chunks),
            in_specs=[
                pl.BlockSpec((row_block, chunk), lambda r, k: (r, k)),
                pl.BlockSpec((row_block, chunk), lambda r, k: (r, k)),
            ],
            out_specs=[
                pl.BlockSpec((row_block, _LANE), lambda r, k: (r, 0)),
                pl.BlockSpec((row_block, _LANE), lambda r, k: (r, 0)),
            ],
        ),
        compiler_params=pltpu.CompilerParams(
            dimension_semantics=("parallel", "arbitrary"),
            vmem_limit_bytes=vmem_limit),
    )(pred2d, tgt2d)

    # Dice finalize in plain JAX (trivial on B scalars).
    eps = jnp.float32(1.0)
    inter_b = inter_out[:, 0].reshape(B, rows_per_batch).sum(axis=1)
    union_b = union_out[:, 0].reshape(B, rows_per_batch).sum(axis=1)
    score = 2.0 * (inter_b + eps) / (union_b + eps)
    return jnp.float32(1.0) - jnp.sum(score) / jnp.float32(B)


def _reference(predictions, targets, activate=False):
    B = targets.shape[0]
    eps = 1.0
    p = predictions.reshape(B, -1).astype(jnp.float32)
    t = targets.reshape(B, -1).astype(jnp.float32)
    if activate:
        p = jax.nn.sigmoid(p)
    inter = jnp.sum(p * t, axis=1)
    union = jnp.sum(p, axis=1) + jnp.sum(t, axis=1)
    score = 2.0 * (inter + eps) / (union + eps)
    return 1.0 - jnp.sum(score) / B


if __name__ == "__main__":
    key = jax.random.PRNGKey(0)
    k1, k2 = jax.random.split(key)

    # Main case: B=2, 16x16 images (packed sublane layout + ragged tail mask).
    B, H, W = 2, 16, 16
    predictions = jax.random.uniform(k1, (B, 1, H, W), dtype=jnp.float32)
    targets = (jax.random.uniform(k2, (B, H, W)) > 0.5).astype(jnp.float32)

    loss = jax.block_until_ready(
        single_class_dice_loss(predictions, targets, activate=False))
    ref = _reference(predictions, targets, activate=False)
    assert jnp.allclose(loss, ref, atol=1e-5, rtol=1e-5), (loss, ref)

    loss_act = jax.block_until_ready(
        single_class_dice_loss(predictions, targets, activate=True))
    ref_act = _reference(predictions, targets, activate=True)
    assert jnp.allclose(loss_act, ref_act, atol=1e-5, rtol=1e-5), (loss_act, ref_act)

    # Multi-row-block path (grid axis 0 > 1, "parallel" split).
    loss_rb = jax.block_until_ready(
        single_class_dice_loss(predictions, targets, activate=False,
                               max_rows_per_block=8))
    assert jnp.allclose(loss_rb, ref, atol=1e-5, rtol=1e-5), (loss_rb, ref)

    # Multi-chunk accumulation path (grid axis 1 > 1) via a small chunk cap.
    k3, k4 = jax.random.split(k1)
    p2 = jax.random.uniform(k3, (2, 1, 64, 64), dtype=jnp.float32)
    t2 = (jax.random.uniform(k4, (2, 64, 64)) > 0.5).astype(jnp.float32)
    loss2 = jax.block_until_ready(
        single_class_dice_loss(p2, t2, activate=False, max_chunk=128))
    ref2 = _reference(p2, t2, activate=False)
    assert jnp.allclose(loss2, ref2, atol=1e-5, rtol=1e-5), (loss2, ref2)

    # Unpacked fallback (N % 8 != 0) with ragged tail + sigmoid path.
    k5, k6 = jax.random.split(k2)
    p3 = jax.random.uniform(k5, (2, 1, 15, 17), dtype=jnp.float32)
    t3 = (jax.random.uniform(k6, (2, 15, 17)) > 0.5).astype(jnp.float32)
    loss3 = jax.block_until_ready(
        single_class_dice_loss(p3, t3, activate=True))
    ref3 = _reference(p3, t3, activate=True)
    assert jnp.allclose(loss3, ref3, atol=1e-5, rtol=1e-5), (loss3, ref3)

    print("KERNEL_OK")
</pallas_src>

<mosaic_0001>
module attributes {stable_mosaic.version = 11 : i64} {
  func.func @_dice_kernel(%arg0: i32, %arg1: i32, %arg2: memref<16x128xf32, #tpu.memory_space<vmem>>, %arg3: memref<16x128xf32, #tpu.memory_space<vmem>>, %arg4: memref<16x128xf32, #tpu.memory_space<vmem>>, %arg5: memref<16x128xf32, #tpu.memory_space<vmem>>) attributes {dimension_semantics = [#tpu.dimension_semantics<parallel>, #tpu.dimension_semantics<arbitrary>], iteration_bounds = array<i64: 1, 1>, scalar_prefetch = 0 : i64, scratch_operands = 0 : i64, tpu.core_type = #tpu.core_type<tc>, window_params = [{transform_indices = @transform_0, window_bounds = array<i64: 16, 128>}, {transform_indices = @transform_1, window_bounds = array<i64: 16, 128>}, {transform_indices = @transform_2, window_bounds = array<i64: 16, 128>}, {transform_indices = @transform_3, window_bounds = array<i64: 16, 128>}]} {
    %c0_i32 = arith.constant 0 : i32
    %0 = arith.cmpi eq, %arg1, %c0_i32 : i32
    %1 = arith.extui %0 : i1 to i32
    %c0_i32_0 = arith.constant 0 : i32
    %2 = arith.cmpi ne, %1, %c0_i32_0 : i32
    scf.if %2 {
      %cst = arith.constant 0.000000e+00 : f32
      %11 = vector.broadcast %cst : f32 to vector<16x128xf32>
      %c0_8 = arith.constant 0 : index
      %c0_9 = arith.constant 0 : index
      %12 = vector.load %arg4[%c0_8, %c0_9] : memref<16x128xf32, #tpu.memory_space<vmem>>, vector<16x128xf32>
      tpu.vector_store %arg4[%c0_8, %c0_9], %11 {strides = array<i32>} : memref<16x128xf32, #tpu.memory_space<vmem>>, vector<16x128xf32>,
      %cst_10 = arith.constant 0.000000e+00 : f32
      %13 = vector.broadcast %cst_10 : f32 to vector<16x128xf32>
      %c0_11 = arith.constant 0 : index
      %c0_12 = arith.constant 0 : index
      %14 = vector.load %arg5[%c0_11, %c0_12] : memref<16x128xf32, #tpu.memory_space<vmem>>, vector<16x128xf32>
      tpu.vector_store %arg5[%c0_11, %c0_12], %13 {strides = array<i32>} : memref<16x128xf32, #tpu.memory_space<vmem>>, vector<16x128xf32>,
    } else {
    }
    %c0 = arith.constant 0 : index
    %c0_1 = arith.constant 0 : index
    %3 = vector.load %arg2[%c0, %c0_1] : memref<16x128xf32, #tpu.memory_space<vmem>>, vector<16x128xf32>
    %c0_2 = arith.constant 0 : index
    %c0_3 = arith.constant 0 : index
    %4 = vector.load %arg3[%c0_2, %c0_3] : memref<16x128xf32, #tpu.memory_space<vmem>>, vector<16x128xf32>
    %c0_i32_4 = arith.constant 0 : i32
    %5 = arith.cmpi ne, %arg1, %c0_i32_4 : i32
    %6 = arith.extui %5 : i1 to i32
    %c0_i32_5 = arith.constant 0 : i32
    %7 = arith.cmpi ne, %6, %c0_i32_5 : i32
    scf.if %7 {
      %11 = arith.mulf %3, %4 : vector<16x128xf32>
      %cst = arith.constant dense<0.000000e+00> : vector<16xf32>
      %12 = vector.multi_reduction <add>, %11, %cst [1] : vector<16x128xf32> to vector<16xf32>
      %13 = vector.shape_cast %12 : vector<16xf32> to vector<16x1xf32>
      %14 = arith.addf %3, %4 : vector<16x128xf32>
      %cst_8 = arith.constant dense<0.000000e+00> : vector<16xf32>
      %15 = vector.multi_reduction <add>, %14, %cst_8 [1] : vector<16x128xf32> to vector<16xf32>
      %16 = vector.shape_cast %15 : vector<16xf32> to vector<16x1xf32>
      %c0_9 = arith.constant 0 : index
      %c0_10 = arith.constant 0 : index
      %17 = vector.load %arg4[%c0_9, %c0_10] : memref<16x128xf32, #tpu.memory_space<vmem>>, vector<16x128xf32>
      %18 = vector.shape_cast %13 : vector<16x1xf32> to vector<16x1xf32>
      %19 = vector.broadcast %18 : vector<16x1xf32> to vector<16x128xf32>
      %20 = arith.addf %17, %19 : vector<16x128xf32>
      %c0_11 = arith.constant 0 : index
      %c0_12 = arith.constant 0 : index
      %21 = vector.load %arg4[%c0_11, %c0_12] : memref<16x128xf32, #tpu.memory_space<vmem>>, vector<16x128xf32>
      tpu.vector_store %arg4[%c0_11, %c0_12], %20 {strides = array<i32>} : memref<16x128xf32, #tpu.memory_space<vmem>>, vector<16x128xf32>,
      %c0_13 = arith.constant 0 : index
      %c0_14 = arith.constant 0 : index
      %22 = vector.load %arg5[%c0_13, %c0_14] : memref<16x128xf32, #tpu.memory_space<vmem>>, vector<16x128xf32>
      %23 = vector.shape_cast %16 : vector<16x1xf32> to vector<16x1xf32>
      %24 = vector.broadcast %23 : vector<16x1xf32> to vector<16x128xf32>
      %25 = arith.addf %22, %24 : vector<16x128xf32>
      %c0_15 = arith.constant 0 : index
      %c0_16 = arith.constant 0 : index
      %26 = vector.load %arg5[%c0_15, %c0_16] : memref<16x128xf32, #tpu.memory_space<vmem>>, vector<16x128xf32>
      tpu.vector_store %arg5[%c0_15, %c0_16], %25 {strides = array<i32>} : memref<16x128xf32, #tpu.memory_space<vmem>>, vector<16x128xf32>,
    } else {
    }
    %c0_i32_6 = arith.constant 0 : i32
    %8 = arith.cmpi eq, %arg1, %c0_i32_6 : i32
    %9 = arith.extui %8 : i1 to i32
    %c0_i32_7 = arith.constant 0 : i32
    %10 = arith.cmpi ne, %9, %c0_i32_7 : i32
    scf.if %10 {
      %11 = tpu.iota {dimensions = array<i32: 1>} : vector<16x128xi32>
      %c32_i32 = arith.constant 32 : i32
      %12 = vector.broadcast %c32_i32 : i32 to vector<16x128xi32>
      %13 = arith.cmpi slt, %11, %12 : vector<16x128xi32>
      %cst = arith.constant 0.000000e+00 : f32
      %14 = vector.broadcast %cst : f32 to vector<16x128xf32>
      %15 = arith.select %13, %3, %14 : vector<16x128xi1>, vector<16x128xf32>
      %cst_8 = arith.constant 0.000000e+00 : f32
      %16 = vector.broadcast %cst_8 : f32 to vector<16x128xf32>
      %17 = arith.select %13, %4, %16 : vector<16x128xi1>, vector<16x128xf32>
      %18 = arith.mulf %15, %17 : vector<16x128xf32>
      %cst_9 = arith.constant dense<0.000000e+00> : vector<16xf32>
      %19 = vector.multi_reduction <add>, %18, %cst_9 [1] : vector<16x128xf32> to vector<16xf32>
      %20 = vector.shape_cast %19 : vector<16xf32> to vector<16x1xf32>
      %21 = arith.addf %15, %17 : vector<16x128xf32>
      %cst_10 = arith.constant dense<0.000000e+00> : vector<16xf32>
      %22 = vector.multi_reduction <add>, %21, %cst_10 [1] : vector<16x128xf32> to vector<16xf32>
      %23 = vector.shape_cast %22 : vector<16xf32> to vector<16x1xf32>
      %c0_11 = arith.constant 0 : index
      %c0_12 = arith.constant 0 : index
      %24 = vector.load %arg4[%c0_11, %c0_12] : memref<16x128xf32, #tpu.memory_space<vmem>>, vector<16x128xf32>
      %25 = vector.shape_cast %20 : vector<16x1xf32> to vector<16x1xf32>
      %26 = vector.broadcast %25 : vector<16x1xf32> to vector<16x128xf32>
      %27 = arith.addf %24, %26 : vector<16x128xf32>
      %c0_13 = arith.constant 0 : index
      %c0_14 = arith.constant 0 : index
      %28 = vector.load %arg4[%c0_13, %c0_14] : memref<16x128xf32, #tpu.memory_space<vmem>>, vector<16x128xf32>
      tpu.vector_store %arg4[%c0_13, %c0_14], %27 {strides = array<i32>} : memref<16x128xf32, #tpu.memory_space<vmem>>, vector<16x128xf32>,
      %c0_15 = arith.constant 0 : index
      %c0_16 = arith.constant 0 : index
      %29 = vector.load %arg5[%c0_15, %c0_16] : memref<16x128xf32, #tpu.memory_space<vmem>>, vector<16x128xf32>
      %30 = vector.shape_cast %23 : vector<16x1xf32> to vector<16x1xf32>
      %31 = vector.broadcast %30 : vector<16x1xf32> to vector<16x128xf32>
      %32 = arith.addf %29, %31 : vector<16x128xf32>
      %c0_17 = arith.constant 0 : index
      %c0_18 = arith.constant 0 : index
      %33 = vector.load %arg5[%c0_17, %c0_18] : memref<16x128xf32, #tpu.memory_space<vmem>>, vector<16x128xf32>
      tpu.vector_store %arg5[%c0_17, %c0_18], %32 {strides = array<i32>} : memref<16x128xf32, #tpu.memory_space<vmem>>, vector<16x128xf32>,
    } else {
    }
    return
  }
  func.func @transform_0(%arg0: i32, %arg1: i32) -> (i32, i32) {
    %c0_i32 = arith.constant 0 : i32
    return %arg0, %arg1 : i32, i32
  }
  func.func @transform_1(%arg0: i32, %arg1: i32) -> (i32, i32) {
    %c0_i32 = arith.constant 0 : i32
    return %arg0, %arg1 : i32, i32
  }
  func.func @transform_2(%arg0: i32, %arg1: i32) -> (i32, i32) {
    %c0_i32 = arith.constant 0 : i32
    %c0_i32_0 = arith.constant 0 : i32
    return %arg0, %c0_i32 : i32, i32
  }
  func.func @transform_3(%arg0: i32, %arg1: i32) -> (i32, i32) {
    %c0_i32 = arith.constant 0 : i32
    %c0_i32_0 = arith.constant 0 : i32
    return %arg0, %c0_i32 : i32, i32
  }
}

</mosaic_0001>

<llo_original>
// kernel: tpu_custom_call.1
$region0: #{tpu_custom_call.1}
  #allocation0 [shape = 'u32[]', space=smem, size = 0x4, offset = 0x4, fixed_abs, tag = 'smem constant byte address 0x4 - core index']
  #allocation1 [shape = 'u32[72,128]{1,0:T(1,128)}', space=vmem, size = 0x9000, scoped, tag = 'internal scratch']
  %s0 = inlined_call_operand.hbm [shape: f32[16,32], index: 0, kind: input, shape index: {}]
  %s1 = inlined_call_operand.hbm [shape: f32[16,32], index: 1, kind: input, shape index: {}]
  %s2 = inlined_call_operand.hbm [shape: f32[16,128], index: 2, kind: output, shape index: {0}]
  %s3 = inlined_call_operand.hbm [shape: f32[16,128], index: 3, kind: output, shape index: {1}]
  %4 = xla_tuple %s2, %s3
  %s5 = sld [smem:[#allocation0]]
  $region46: #{tpu_custom_call.1} parent=0
    _
  %s7 = ssub.s32 1, %s5
  %s8 = scalar_select 0, %s7, %s5
  $region1: #{tpu_custom_call.1} parent=0
    #allocation2 [shape = 'u8[8192]{0}', space=vmem, size = 0x2000, scoped, tag = 'input window, operand 0, single buffered']
    #allocation3 [shape = 's32[1]{0}', space=sflag, size = 0x4, scoped, tag = 'scoped memory for tpu_custom_call.1']
    #allocation4 [shape = 's32[1]{0}', space=sflag, size = 0x4, scoped, tag = 'scoped memory for tpu_custom_call.1']
    #allocation5 [shape = 'u8[8192]{0}', space=vmem, size = 0x2000, scoped, tag = 'input window, operand 1, single buffered']
    #allocation6 [shape = 's32[1]{0}', space=sflag, size = 0x4, scoped, tag = 'scoped memory for tpu_custom_call.1']
    #allocation7 [shape = 'u8[8192]{0}', space=vmem, size = 0x2000, scoped, tag = 'output window, operand 0, single buffered']
    #allocation8 [shape = 'u8[8192]{0}', space=vmem, size = 0x2000, scoped, tag = 'output window, operand 1, single buffered']
    #allocation9 [shape = 's32[1]{0}', space=sflag, size = 0x4, scoped, tag = 'scoped memory for tpu_custom_call.1']
    %9 = vsyncpa [#allocation3], 0
    %10 = vsyncpa [#allocation6], 0
    %11 = vsyncpa [#allocation4], 0
    %12 = vsyncpa [#allocation9], 0
    // Predicated region
    $region2: #{tpu_custom_call.1} parent=1 // pred_check
      _
    $region3: #{tpu_custom_call.1} parent=1 // pred_check_branch
      %14 = sbr.rel (0) target = $region5
    $region4: #{tpu_custom_call.1} parent=1 // pred_region
      %16 = vsyncadd [#allocation3], 0
      %s17 = sshll.u32 %s0, 4
      %s18 = int_to_ptr.hbm [resolvable:$true] %s17
      %s19 = sshll.u32 [#allocation2], 4
      %s20 = int_to_ptr.vmem [resolvable:$true] %s19
      %25 = dma.hbm_to_vmem [thread:$0]  %s18, 256, %s20, [#allocation3], 128, 128, 8
    $region5: #{tpu_custom_call.1} parent=1 // pred_fallthru
      _
    // Predicated region
    $region6: #{tpu_custom_call.1} parent=1 // pred_check
      _
    $region7: #{tpu_custom_call.1} parent=1 // pred_check_branch
      %27 = sbr.rel (0) target = $region9
    $region8: #{tpu_custom_call.1} parent=1 // pred_region
      %29 = vsyncadd [#allocation6], 0
      %s30 = sshll.u32 %s1, 4
      %s31 = int_to_ptr.hbm [resolvable:$true] %s30
      %s32 = sshll.u32 [#allocation5], 4
      %s33 = int_to_ptr.vmem [resolvable:$true] %s32
      %38 = dma.hbm_to_vmem [thread:$0]  %s31, 256, %s33, [#allocation6], 128, 128, 8
    $region9: #{tpu_custom_call.1} parent=1 // pred_fallthru
      _
    // Predicated region
    $region10: #{tpu_custom_call.1} parent=1 // pred_check
      _
    $region11: #{tpu_custom_call.1} parent=1 // pred_check_branch
      %40 = sbr.rel (0) target = $region13
    $region12: #{tpu_custom_call.1} parent=1 // pred_region
      %42 = dma.done [#allocation3], 256
    $region13: #{tpu_custom_call.1} parent=1 // pred_fallthru
      _
    // Predicated region
    $region14: #{tpu_custom_call.1} parent=1 // pred_check
      _
    $region15: #{tpu_custom_call.1} parent=1 // pred_check_branch
      %44 = sbr.rel (0) target = $region17
    $region16: #{tpu_custom_call.1} parent=1 // pred_region
      %46 = dma.done [#allocation6], 256
    $region17: #{tpu_custom_call.1} parent=1 // pred_fallthru
      _
    %p47 = scmp.eq.s32.totalorder 0, 0
    // Predicated region
    $region18: #{tpu_custom_call.1} parent=1 // pred_check
      %p48 = pneg %p47
    $region19: #{tpu_custom_call.1} parent=1 // pred_check_branch
      %50 = sbr.rel (%p48) target = $region21
    $region20: #{tpu_custom_call.1} parent=1 // pred_region
      %51 = vst [vmem:[#allocation7] sm:$0xff] 0.0
      %52 = vst [vmem:[#allocation7 + $0x8] sm:$0xff] 0.0
      %53 = vst [vmem:[#allocation8] sm:$0xff] 0.0
      %54 = vst [vmem:[#allocation8 + $0x8] sm:$0xff] 0.0
    $region21: #{tpu_custom_call.1} parent=1 // pred_fallthru
      _
    %v55 = vld [vmem:[#allocation2] sm:$0xff]
    %v56 = vld [vmem:[#allocation2 + $0x8] sm:$0xff]
    %v57 = vld [vmem:[#allocation5] sm:$0xff]
    %v58 = vld [vmem:[#allocation5 + $0x8] sm:$0xff]
    %p59 = scmp.ne.s32.totalorder 0, 0
    // Predicated region
    $region22: #{tpu_custom_call.1} parent=1 // pred_check
      %p60 = pneg %p59
    $region23: #{tpu_custom_call.1} parent=1 // pred_check_branch
      %62 = sbr.rel (%p60) target = $region25
    $region24: #{tpu_custom_call.1} parent=1 // pred_region
      %v63 = vmul.f32 %v55, %v57
      %v64 = vmul.f32 %v56, %v58
      %65 = vadd.xlane.f32.xlu0 %v63
      %v66 = vpop.xlane.xlu0 %65
      %67 = vadd.xlane.f32.xlu0 %v64
      %v68 = vpop.xlane.xlu0 %67
      %v69 = vadd.f32 %v55, %v57
      %v70 = vadd.f32 %v56, %v58
      %71 = vadd.xlane.f32.xlu0 %v69
      %v72 = vpop.xlane.xlu0 %71
      %73 = vadd.xlane.f32.xlu0 %v70
      %v74 = vpop.xlane.xlu0 %73
      %v75 = vld [vmem:[#allocation7] sm:$0xff]
      %v76 = vld [vmem:[#allocation7 + $0x8] sm:$0xff]
      %v77 = vadd.f32 %v75, %v66
      %v78 = vadd.f32 %v76, %v68
      %79 = vst [vmem:[#allocation7] sm:$0xff] %v77
      %80 = vst [vmem:[#allocation7 + $0x8] sm:$0xff] %v78
      %v81 = vld [vmem:[#allocation8] sm:$0xff]
      %v82 = vld [vmem:[#allocation8 + $0x8] sm:$0xff]
      %v83 = vadd.f32 %v81, %v72
      %v84 = vadd.f32 %v82, %v74
      %85 = vst [vmem:[#allocation8] sm:$0xff] %v83
      %86 = vst [vmem:[#allocation8 + $0x8] sm:$0xff] %v84
    $region25: #{tpu_custom_call.1} parent=1 // pred_fallthru
      _
    // Predicated region
    $region26: #{tpu_custom_call.1} parent=1 // pred_check
      %p87 = pneg %p47
    $region27: #{tpu_custom_call.1} parent=1 // pred_check_branch
      %89 = sbr.rel (%p87) target = $region29
    $region28: #{tpu_custom_call.1} parent=1 // pred_region
      %v90 = vlaneseq
      %v91 = vand.u32 %v90, 127
      %vm92 = vcmp.lt.s32.totalorder %v91, 32
      %v93 = vsel %vm92, %v55, 0.0
      %v94 = vsel %vm92, %v56, 0.0
      %v95 = vsel %vm92, %v57, 0.0
      %v96 = vsel %vm92, %v58, 0.0
      %v97 = vmul.f32 %v93, %v95
      %v98 = vmul.f32 %v94, %v96
      %99 = vadd.xlane.f32.xlu0 %v97
      %v100 = vpop.xlane.xlu0 %99
      %101 = vadd.xlane.f32.xlu0 %v98
      %v102 = vpop.xlane.xlu0 %101
      %v103 = vadd.f32 %v93, %v95
      %v104 = vadd.f32 %v94, %v96
      %105 = vadd.xlane.f32.xlu0 %v103
      %v106 = vpop.xlane.xlu0 %105
      %107 = vadd.xlane.f32.xlu0 %v104
      %v108 = vpop.xlane.xlu0 %107
      %v109 = vld [vmem:[#allocation7] sm:$0xff]
      %v110 = vld [vmem:[#allocation7 + $0x8] sm:$0xff]
      %v111 = vadd.f32 %v109, %v100
      %v112 = vadd.f32 %v110, %v102
      %113 = vst [vmem:[#allocation7] sm:$0xff] %v111
      %114 = vst [vmem:[#allocation7 + $0x8] sm:$0xff] %v112
      %v115 = vld [vmem:[#allocation8] sm:$0xff]
      %v116 = vld [vmem:[#allocation8 + $0x8] sm:$0xff]
      %v117 = vadd.f32 %v115, %v106
      %v118 = vadd.f32 %v116, %v108
      %119 = vst [vmem:[#allocation8] sm:$0xff] %v117
      %120 = vst [vmem:[#allocation8 + $0x8] sm:$0xff] %v118
    $region29: #{tpu_custom_call.1} parent=1 // pred_fallthru
      _
    // Predicated region
    $region30: #{tpu_custom_call.1} parent=1 // pred_check
      _
    $region31: #{tpu_custom_call.1} parent=1 // pred_check_branch
      %122 = sbr.rel (0) target = $region33
    $region32: #{tpu_custom_call.1} parent=1 // pred_region
      %124 = vsyncadd [#allocation4], 0
      %s125 = sshll.u32 [#allocation7], 4
      %s126 = int_to_ptr.vmem [resolvable:$true] %s125
      %s127 = sshll.u32 %s2, 4
      %s128 = int_to_ptr.hbm [resolvable:$true] %s127
      %133 = dma.vmem_to_hbm [thread:$0]  %s126, 256, %s128, [#allocation4], 128, 128, 8
    $region33: #{tpu_custom_call.1} parent=1 // pred_fallthru
      _
    // Predicated region
    $region34: #{tpu_custom_call.1} parent=1 // pred_check
      _
    $region35: #{tpu_custom_call.1} parent=1 // pred_check_branch
      %135 = sbr.rel (0) target = $region37
    $region36: #{tpu_custom_call.1} parent=1 // pred_region
      %137 = vsyncadd [#allocation9], 0
      %s138 = sshll.u32 [#allocation8], 4
      %s139 = int_to_ptr.vmem [resolvable:$true] %s138
      %s140 = sshll.u32 %s3, 4
      %s141 = int_to_ptr.hbm [resolvable:$true] %s140
      %146 = dma.vmem_to_hbm [thread:$0]  %s139, 256, %s141, [#allocation9], 128, 128, 8
    $region37: #{tpu_custom_call.1} parent=1 // pred_fallthru
      _
    // Predicated region
    $region38: #{tpu_custom_call.1} parent=1 // pred_check
      _
    $region39: #{tpu_custom_call.1} parent=1 // pred_check_branch
      %148 = sbr.rel (0) target = $region41
    $region40: #{tpu_custom_call.1} parent=1 // pred_region
      %150 = dma.done [#allocation4], 256
    $region41: #{tpu_custom_call.1} parent=1 // pred_fallthru
      _
    // Predicated region
    $region42: #{tpu_custom_call.1} parent=1 // pred_check
      _
    $region43: #{tpu_custom_call.1} parent=1 // pred_check_branch
      %152 = sbr.rel (0) target = $region45
    $region44: #{tpu_custom_call.1} parent=1 // pred_region
      %154 = dma.done [#allocation9], 256
    $region45: #{tpu_custom_call.1} parent=1 // pred_fallthru
      _
    %155 = vsyncpa [#allocation3], 1
    %156 = vsyncpa [#allocation6], 1
    %157 = vsyncpa [#allocation4], 1
    %158 = vsyncpa [#allocation9], 1

</llo_original>
